<compile_context>
chip_gen: v6e
topology: v6e:2x2x1
jax: 0.10.0
libtpu: 0.0.40
codegen_flags: <defaults>
</compile_context>

<pallas_src>
import numpy as np
import jax
import jax.numpy as jnp
from jax.experimental import pallas as pl
from jax.experimental.pallas import tpu as pltpu

NUM_CLASSES = 12
LANE_WIDTH = 384          # 12 classes * 32 samples -> 3 full 128-lane vregs
SUBLANE_PAD = 32          # row-tile granularity (covers f32 / bf16 / int8 tiling)

# Class weights from the module's __init__ (pos_weight, C = 12), pre-tiled to
# the 384-wide lane-dense layout; passed to the kernel as a small input.
_POS_WEIGHT = np.array(
    [7.1008924, 15.63964869, 5.47108051, 2.80360066, 1.5152332, 1.89083564,
     3.04637044, 34.04600245, 32.47861156, 36.76637801, 0.58118674, 11.1586486],
    dtype=np.float32,
)
_PW_MINUS_1_TILED = (
    np.tile(_POS_WEIGHT, LANE_WIDTH // NUM_CLASSES).reshape(1, LANE_WIDTH) - 1.0
).astype(np.float32)


def _cdiv(a, b):
    return -(-a // b)


def _round_up(a, b):
    return _cdiv(a, b) * b


def _bce_sum_kernel(x_ref, lab_ref, pwm1_ref, out_ref, acc_ref):
    """One (tile_rows, 384) tile: elementwise loss + partial-sum accumulation."""
    k = pl.program_id(1)

    @pl.when(k == 0)
    def _init():
        acc_ref[...] = jnp.zeros_like(acc_ref)

    x = x_ref[...].astype(jnp.float32)
    # Labels are exact small integers {-1, 0, 1}; upcast once, compare exactly.
    lab = lab_ref[...].astype(jnp.float32)
    mask = (lab != -1.0).astype(jnp.float32)      # 1 - labels.eq(-1).float()
    tgt = (lab > 0.0).astype(jnp.float32)         # labels.gt(0).float()

    # 1 + (pos_weight - 1) * target ; (1, 384) weight row broadcasts over rows.
    log_weight = 1.0 + pwm1_ref[...] * tgt
    # log(1 + exp(-x)) computed stably: relu(-x) + log1p(exp(-|x|))
    softplus_neg_x = jnp.log1p(jnp.exp(-jnp.abs(x))) + jnp.maximum(-x, 0.0)
    per_elem = mask * ((1.0 - tgt) * x + log_weight * softplus_neg_x)

    # Partial-reduce the (tile_rows, 384) tile onto the resident (8, 384)
    # accumulator.  The reshape only splits the leading (major) dim, so it is
    # layout-preserving and the reduce is plain VPU adds (no cross-lane work).
    tile_rows = per_elem.shape[0]
    acc_ref[...] += jnp.sum(
        per_elem.reshape(tile_rows // 8, 8, LANE_WIDTH), axis=0)

    @pl.when(k == pl.num_programs(1) - 1)
    def _finalize():
        out_ref[...] = acc_ref[...]


def abawmt_bce_sigmoid(x, labels, size_average=True, *,
                       row_tile=512, num_parts=2,
                       vmem_limit_bytes=32 * 1024 * 1024):
    """x: (N, 12) logits (any float dtype); labels: (N, 12) values in {-1, 0, 1}
    (int8 / int32 / float all accepted).  Returns the scalar loss."""
    n, c = x.shape
    if c != NUM_CLASSES:
        raise ValueError(f"expected {NUM_CLASSES} classes, got {c}")
    if labels.shape != x.shape:
        raise ValueError("labels must have the same shape as x")

    total = n * NUM_CLASSES
    rows = _cdiv(total, LANE_WIDTH)

    tile_rows = min(row_tile,
                    _round_up(max(_cdiv(rows, num_parts), 1), SUBLANE_PAD))
    rows_per_part = _round_up(_cdiv(rows, num_parts), tile_rows)
    num_row_tiles = rows_per_part // tile_rows
    rows_padded = num_parts * rows_per_part
    total_padded = rows_padded * LANE_WIDTH

    # Lane-dense layout: row-major flatten, pad only if needed (padded slots
    # carry labels == -1 so the kernel masks them to zero), view as
    # (rows_padded, 384).  When no padding is required this is a zero-copy
    # reshape; inputs keep their native dtypes (bf16 x / int8 labels are fine).
    x_flat = x.reshape(-1)
    lab_flat = labels.reshape(-1)
    pad = total_padded - total
    if pad:
        x_flat = jnp.concatenate([x_flat, jnp.zeros((pad,), x_flat.dtype)])
        lab_flat = jnp.concatenate(
            [lab_flat, jnp.full((pad,), -1, lab_flat.dtype)])
    x2d = x_flat.reshape(rows_padded, LANE_WIDTH)
    lab2d = lab_flat.reshape(rows_padded, LANE_WIDTH)
    pwm1 = jnp.asarray(_PW_MINUS_1_TILED)          # (1, 384) kernel input

    partial = pl.pallas_call(
        _bce_sum_kernel,
        out_shape=jax.ShapeDtypeStruct((num_parts * 8, LANE_WIDTH), jnp.float32),
        grid=(num_parts, num_row_tiles),
        in_specs=[
            pl.BlockSpec((tile_rows, LANE_WIDTH),
                         lambda p, k: (p * num_row_tiles + k, 0)),
            pl.BlockSpec((tile_rows, LANE_WIDTH),
                         lambda p, k: (p * num_row_tiles + k, 0)),
            pl.BlockSpec((1, LANE_WIDTH), lambda p, k: (0, 0)),
        ],
        out_specs=pl.BlockSpec((8, LANE_WIDTH), lambda p, k: (p, 0)),
        scratch_shapes=[pltpu.VMEM((8, LANE_WIDTH), jnp.float32)],
        compiler_params=pltpu.CompilerParams(
            dimension_semantics=("parallel", "arbitrary"),
            vmem_limit_bytes=vmem_limit_bytes,
        ),
    )(x2d, lab2d, pwm1)

    loss = jnp.sum(partial)
    if size_average:
        loss = loss / jnp.float32(n)
    return loss


def _reference(x, labels, size_average=True):
    """Pure-JAX reference of the same math (for the self-check)."""
    xf = x.astype(jnp.float32)
    lab = labels.astype(jnp.float32)
    mask = jnp.where(lab == -1.0, 0.0, 1.0)
    tgt = jnp.where(lab > 0.0, 1.0, 0.0)
    pw = jnp.asarray(_POS_WEIGHT).reshape(1, NUM_CLASSES)
    lw = 1.0 + (pw - 1.0) * tgt
    sp = jnp.log1p(jnp.exp(-jnp.abs(xf))) + jnp.maximum(-xf, 0.0)
    loss = jnp.sum(mask * ((1.0 - tgt) * xf + lw * sp))
    if size_average:
        loss = loss / jnp.float32(x.shape[0])
    return loss


if __name__ == "__main__":
    key = jax.random.PRNGKey(0)
    k1, k2, k3, k4 = jax.random.split(key, 4)

    # Small deterministic example: batch of 8 samples x 12 AU classes,
    # bandwidth-lean int8 labels in {-1, 0, 1}.
    n, c = 8, NUM_CLASSES
    x = jax.random.normal(k1, (n, c), dtype=jnp.float32)
    labels = jax.random.randint(k2, (n, c), minval=-1, maxval=2).astype(jnp.int8)

    loss = abawmt_bce_sigmoid(x, labels)
    jax.block_until_ready(loss)
    ref = _reference(x, labels)
    assert jnp.allclose(loss, ref, rtol=1e-5, atol=1e-5), (loss, ref)

    # Second tiny case: batch not a multiple of 32 and float labels — exercises
    # the padding path (labels == -1 padding) and both "parallel" parts.
    n2 = 37
    x2 = jax.random.normal(k3, (n2, c), dtype=jnp.float32)
    labels2 = jax.random.randint(
        k4, (n2, c), minval=-1, maxval=2).astype(jnp.float32)
    loss2 = abawmt_bce_sigmoid(x2, labels2)
    jax.block_until_ready(loss2)
    ref2 = _reference(x2, labels2)
    assert jnp.allclose(loss2, ref2, rtol=1e-5, atol=1e-5), (loss2, ref2)

    print("KERNEL_OK")
</pallas_src>

<mosaic_0001>
module attributes {stable_mosaic.version = 11 : i64} {
  func.func @_bce_sum_kernel(%arg0: i32, %arg1: i32, %arg2: memref<32x384xf32, #tpu.memory_space<vmem>>, %arg3: memref<32x384xi8, #tpu.memory_space<vmem>>, %arg4: memref<1x384xf32, #tpu.memory_space<vmem>>, %arg5: memref<8x384xf32, #tpu.memory_space<vmem>>, %arg6: memref<8x384xf32, #tpu.memory_space<vmem>>) attributes {dimension_semantics = [#tpu.dimension_semantics<parallel>, #tpu.dimension_semantics<arbitrary>], iteration_bounds = array<i64: 2, 1>, scalar_prefetch = 0 : i64, scratch_operands = 1 : i64, tpu.core_type = #tpu.core_type<tc>, window_params = [{transform_indices = @transform_0, window_bounds = array<i64: 32, 384>}, {transform_indices = @transform_1, window_bounds = array<i64: 32, 384>}, {pipeline_mode = #tpu.pipeline_mode<synchronous>, transform_indices = @transform_2, window_bounds = array<i64: 1, 384>}, {transform_indices = @transform_3, window_bounds = array<i64: 8, 384>}]} {
    %c0_i32 = arith.constant 0 : i32
    %0 = arith.cmpi eq, %arg1, %c0_i32 : i32
    %1 = arith.extui %0 : i1 to i32
    %c0_i32_0 = arith.constant 0 : i32
    %2 = arith.cmpi ne, %1, %c0_i32_0 : i32
    scf.if %2 {
      %cst_19 = arith.constant 0.000000e+00 : f32
      %43 = vector.broadcast %cst_19 : f32 to vector<8x384xf32>
      %c0_20 = arith.constant 0 : index
      %c0_21 = arith.constant 0 : index
      %44 = vector.load %arg6[%c0_20, %c0_21] : memref<8x384xf32, #tpu.memory_space<vmem>>, vector<8x384xf32>
      tpu.vector_store %arg6[%c0_20, %c0_21], %43 {strides = array<i32>} : memref<8x384xf32, #tpu.memory_space<vmem>>, vector<8x384xf32>,
    } else {
    }
    %c0 = arith.constant 0 : index
    %c0_1 = arith.constant 0 : index
    %3 = vector.load %arg2[%c0, %c0_1] : memref<32x384xf32, #tpu.memory_space<vmem>>, vector<32x384xf32>
    %c0_2 = arith.constant 0 : index
    %c0_3 = arith.constant 0 : index
    %4 = vector.load %arg3[%c0_2, %c0_3] : memref<32x384xi8, #tpu.memory_space<vmem>>, vector<32x384xi8>
    %5 = arith.sitofp %4 : vector<32x384xi8> to vector<32x384xf32>
    %cst = arith.constant -1.000000e+00 : f32
    %6 = vector.broadcast %cst : f32 to vector<32x384xf32>
    %7 = arith.cmpf one, %5, %6 : vector<32x384xf32>
    %8 = arith.extui %7 : vector<32x384xi1> to vector<32x384xi32>
    %9 = arith.sitofp %8 : vector<32x384xi32> to vector<32x384xf32>
    %cst_4 = arith.constant 0.000000e+00 : f32
    %10 = vector.broadcast %cst_4 : f32 to vector<32x384xf32>
    %11 = arith.cmpf ogt, %5, %10 : vector<32x384xf32>
    %12 = arith.extui %11 : vector<32x384xi1> to vector<32x384xi32>
    %13 = arith.sitofp %12 : vector<32x384xi32> to vector<32x384xf32>
    %c0_5 = arith.constant 0 : index
    %c0_6 = arith.constant 0 : index
    %14 = vector.load %arg4[%c0_5, %c0_6] : memref<1x384xf32, #tpu.memory_space<vmem>>, vector<1x384xf32>
    %15 = vector.broadcast %14 : vector<1x384xf32> to vector<32x384xf32>
    %16 = arith.mulf %15, %13 : vector<32x384xf32>
    %cst_7 = arith.constant 1.000000e+00 : f32
    %17 = vector.broadcast %cst_7 : f32 to vector<32x384xf32>
    %18 = arith.addf %17, %16 : vector<32x384xf32>
    %19 = math.absf %3 : vector<32x384xf32>
    %cst_8 = arith.constant 0.000000e+00 : f32
    %20 = vector.broadcast %cst_8 : f32 to vector<32x384xf32>
    %21 = arith.subf %20, %19 : vector<32x384xf32>
    %22 = math.exp %21 : vector<32x384xf32>
    %23 = math.log1p %22 : vector<32x384xf32>
    %cst_9 = arith.constant 0.000000e+00 : f32
    %24 = vector.broadcast %cst_9 : f32 to vector<32x384xf32>
    %25 = arith.subf %24, %3 : vector<32x384xf32>
    %cst_10 = arith.constant 0.000000e+00 : f32
    %26 = vector.broadcast %cst_10 : f32 to vector<32x384xf32>
    %27 = arith.maximumf %25, %26 : vector<32x384xf32>
    %28 = arith.addf %23, %27 : vector<32x384xf32>
    %cst_11 = arith.constant 1.000000e+00 : f32
    %29 = vector.broadcast %cst_11 : f32 to vector<32x384xf32>
    %30 = arith.subf %29, %13 : vector<32x384xf32>
    %31 = arith.mulf %30, %3 : vector<32x384xf32>
    %32 = arith.mulf %18, %28 : vector<32x384xf32>
    %33 = arith.addf %31, %32 : vector<32x384xf32>
    %34 = arith.mulf %9, %33 : vector<32x384xf32>
    %c0_12 = arith.constant 0 : index
    %c0_13 = arith.constant 0 : index
    %35 = vector.load %arg6[%c0_12, %c0_13] : memref<8x384xf32, #tpu.memory_space<vmem>>, vector<8x384xf32>
    %36 = vector.shape_cast %34 : vector<32x384xf32> to vector<4x8x384xf32>
    %cst_14 = arith.constant dense<0.000000e+00> : vector<8x384xf32>
    %37 = vector.multi_reduction <add>, %36, %cst_14 [0] : vector<4x8x384xf32> to vector<8x384xf32>
    %38 = arith.addf %35, %37 : vector<8x384xf32>
    %c0_15 = arith.constant 0 : index
    %c0_16 = arith.constant 0 : index
    %39 = vector.load %arg6[%c0_15, %c0_16] : memref<8x384xf32, #tpu.memory_space<vmem>>, vector<8x384xf32>
    tpu.vector_store %arg6[%c0_15, %c0_16], %38 {strides = array<i32>} : memref<8x384xf32, #tpu.memory_space<vmem>>, vector<8x384xf32>,
    %c0_i32_17 = arith.constant 0 : i32
    %40 = arith.cmpi eq, %arg1, %c0_i32_17 : i32
    %41 = arith.extui %40 : i1 to i32
    %c0_i32_18 = arith.constant 0 : i32
    %42 = arith.cmpi ne, %41, %c0_i32_18 : i32
    scf.if %42 {
      %c0_19 = arith.constant 0 : index
      %c0_20 = arith.constant 0 : index
      %43 = vector.load %arg6[%c0_19, %c0_20] : memref<8x384xf32, #tpu.memory_space<vmem>>, vector<8x384xf32>
      %c0_21 = arith.constant 0 : index
      %c0_22 = arith.constant 0 : index
      %44 = vector.load %arg5[%c0_21, %c0_22] : memref<8x384xf32, #tpu.memory_space<vmem>>, vector<8x384xf32>
      tpu.vector_store %arg5[%c0_21, %c0_22], %43 {strides = array<i32>} : memref<8x384xf32, #tpu.memory_space<vmem>>, vector<8x384xf32>,
    } else {
    }
    return
  }
  func.func @transform_0(%arg0: i32, %arg1: i32) -> (i32, i32) {
    %c1_i32 = arith.constant 1 : i32
    %0 = arith.muli %arg0, %c1_i32 : i32
    %1 = arith.addi %0, %arg1 : i32
    %c0_i32 = arith.constant 0 : i32
    %c0_i32_0 = arith.constant 0 : i32
    return %1, %c0_i32 : i32, i32
  }
  func.func @transform_1(%arg0: i32, %arg1: i32) -> (i32, i32) {
    %c1_i32 = arith.constant 1 : i32
    %0 = arith.muli %arg0, %c1_i32 : i32
    %1 = arith.addi %0, %arg1 : i32
    %c0_i32 = arith.constant 0 : i32
    %c0_i32_0 = arith.constant 0 : i32
    return %1, %c0_i32 : i32, i32
  }
  func.func @transform_2(%arg0: i32, %arg1: i32) -> (i32, i32) {
    %c0_i32 = arith.constant 0 : i32
    %c0_i32_0 = arith.constant 0 : i32
    %c0_i32_1 = arith.constant 0 : i32
    return %c0_i32, %c0_i32_0 : i32, i32
  }
  func.func @transform_3(%arg0: i32, %arg1: i32) -> (i32, i32) {
    %c0_i32 = arith.constant 0 : i32
    %c0_i32_0 = arith.constant 0 : i32
    return %arg0, %c0_i32 : i32, i32
  }
}

</mosaic_0001>

<llo_original>
// kernel: tpu_custom_call.1
$region0: #{tpu_custom_call.1}
  #allocation0 [shape = 'u32[]', space=smem, size = 0x4, offset = 0x4, fixed_abs, tag = 'smem constant byte address 0x4 - core index']
  #allocation1 [shape = 'u32[144,128]{1,0:T(1,128)}', space=vmem, size = 0x12000, scoped, tag = 'internal scratch']
  #allocation2 [shape = 'f32[8,384]{1,0:T(8,128)}', space=vmem, size = 0x3000, scoped, tag = 'scratch operand']
  %s0 = inlined_call_operand.hbm [shape: f32[64,384], index: 0, kind: input, shape index: {}]
  %s1 = inlined_call_operand.hbm [shape: s8[64,384], index: 1, kind: input, shape index: {}]
  %s2 = inlined_call_operand.vmem [shape: f32[1,384], index: 2, kind: input, shape index: {}]
  %s3 = inlined_call_operand.hbm [shape: f32[16,384], index: 3, kind: output, shape index: {}]
  %s4 = sld [smem:[#allocation0]]
  $region61: #{tpu_custom_call.1} parent=0
    _
  %s6 = ssub.s32 1, %s4
  %s7 = scalar_select 0, %s6, %s4
  $region1: #{tpu_custom_call.1} parent=0
    #allocation3 [shape = 'u8[98304]{0}', space=vmem, size = 0x18000, scoped, tag = 'input window, operand 0']
    #allocation4 [shape = 's32[2]{0}', space=sflag, size = 0x8, scoped, tag = 'scoped memory for tpu_custom_call.1']
    #allocation5 [shape = 's32[2]{0}', space=sflag, size = 0x8, scoped, tag = 'scoped memory for tpu_custom_call.1']
    #allocation6 [shape = 'u8[24576]{0}', space=vmem, size = 0x6000, scoped, tag = 'input window, operand 1']
    #allocation7 [shape = 's32[2]{0}', space=sflag, size = 0x8, scoped, tag = 'scoped memory for tpu_custom_call.1']
    #allocation8 [shape = 'u8[24576]{0}', space=vmem, size = 0x6000, scoped, tag = 'output window, operand 0']
    %8 = vsyncpa [#allocation4], 0
    %s9 = scalar_lea.sflag [#allocation4], 1
    %10 = vsyncpa %s9, 0
    %11 = vsyncpa [#allocation7], 0
    %s12 = scalar_lea.sflag [#allocation7], 1
    %13 = vsyncpa %s12, 0
    %14 = vsyncpa [#allocation5], 0
    %s15 = scalar_lea.sflag [#allocation5], 1
    %16 = vsyncpa %s15, 0
    loop: start=0, step=1, limit=4
    $region2: #{tpu_custom_call.1} parent=1 // loop_pre_header
      _
    $region3: #{tpu_custom_call.1} parent=1 // loop_header
      %s18 = sphi 0, %s22
      %p19 = scmp.ge.s32.totalorder %s18, 4
      %s25 = sphi 0, %s37
      %s26 = sphi 0, %s33
      %s27 = sphi 0, %s25
      %s28 = sphi 0, %s26
      %s29 = sphi 0, %s27
      %s30 = sphi 0, %s28
      %s42 = sphi 0, %s44
      %s45 = sphi 0, %s42
      %s46 = sphi 0, %s45
      %s62 = sphi 0, %s46
      %s70 = sphi 0, %s72
      %s73 = sphi 0, %s70
      %s74 = sphi 0, %s73
      %s90 = sphi 0, %s74
      %s94 = sphi 0, %s94
      %s96 = sphi 0, %s94
      %s97 = sphi 0, %s96
      %s111 = sphi 0, %s97
      %s117 = sphi 0, %s119
      %s120 = sphi 0, %s117
      %s121 = sphi 0, %s120
      %s137 = sphi 0, %s121
    $region4: #{tpu_custom_call.1} parent=1 // loop_header_branch
      %21 = sbr.rel (%p19) target = $region8
    $region5: #{tpu_custom_call.1} parent=1 // loop_body
      %s23 = ssub.s32 %s18, 1
      %s24 = ssub.s32 %s18, 2
      %s31 = sadd.s32 1, %s26
      %p32 = scmp.ge.s32.totalorder %s31, 1
      %s33 = scalar_select %p32, 0, %s31
      %s34 = sadd.s32 1, %s25
      %s35 = scalar_select %p32, %s34, %s25
      %p36 = scmp.ge.s32.totalorder %s35, 2
      %s37 = scalar_select %p36, 0, %s35
      %s38 = sadd.s32 %s25, %s26
      %s39 = sadd.s32 %s37, %s33
      %s40 = ssub.s32 %s38, %s39
      %p41 = scmp.eq.s32.totalorder %s40, 0
      %s43 = sadd.s32 %s42, 1
      %s44 = scalar_select %p41, %s42, %s43
      %p47 = pneg %p41
      %p48 = scmp.eq.s32.totalorder %s18, 1
      %p49 = por %p47, %p48
      %p50 = scmp.ne.s32.totalorder %s42, %s45
      %p51 = scmp.eq.s32.totalorder %s18, 0
      %p52 = por %p50, %p51
      %p53 = scmp.ne.s32.totalorder %s42, %s45
      %p54 = scmp.eq.s32.totalorder %s23, 1
      %p55 = por %p53, %p54
      %p56 = scmp.ne.s32.totalorder %s45, %s46
      %p57 = scmp.eq.s32.totalorder %s23, 0
      %p58 = por %p56, %p57
      %p59 = scmp.ne.s32.totalorder %s45, %s46
      %p60 = scmp.eq.s32.totalorder %s24, 1
      %p61 = por %p59, %p60
      %p63 = scmp.ne.s32.totalorder %s46, %s62
      %p64 = scmp.eq.s32.totalorder %s24, 0
      %p65 = por %p63, %p64
      %s66 = sadd.s32 %s25, %s26
      %s67 = sadd.s32 %s37, %s33
      %s68 = ssub.s32 %s66, %s67
      %p69 = scmp.eq.s32.totalorder %s68, 0
      %s71 = sadd.s32 %s70, 1
      %s72 = scalar_select %p69, %s70, %s71
      %p75 = pneg %p69
      %p76 = scmp.eq.s32.totalorder %s18, 1
      %p77 = por %p75, %p76
      %p78 = scmp.ne.s32.totalorder %s70, %s73
      %p79 = scmp.eq.s32.totalorder %s18, 0
      %p80 = por %p78, %p79
      %p81 = scmp.ne.s32.totalorder %s70, %s73
      %p82 = scmp.eq.s32.totalorder %s23, 1
      %p83 = por %p81, %p82
      %p84 = scmp.ne.s32.totalorder %s73, %s74
      %p85 = scmp.eq.s32.totalorder %s23, 0
      %p86 = por %p84, %p85
      %p87 = scmp.ne.s32.totalorder %s73, %s74
      %p88 = scmp.eq.s32.totalorder %s24, 1
      %p89 = por %p87, %p88
      %p91 = scmp.ne.s32.totalorder %s74, %s90
      %p92 = scmp.eq.s32.totalorder %s24, 0
      %p93 = por %p91, %p92
      %s95 = sadd.s32 %s94, 1
      %p98 = scmp.eq.s32.totalorder %s18, 1
      %p99 = scmp.ne.s32.totalorder %s94, %s96
      %p100 = scmp.eq.s32.totalorder %s18, 0
      %p101 = por %p99, %p100
      %p102 = scmp.ne.s32.totalorder %s94, %s96
      %p103 = scmp.eq.s32.totalorder %s23, 1
      %p104 = por %p102, %p103
      %p105 = scmp.ne.s32.totalorder %s96, %s97
      %p106 = scmp.eq.s32.totalorder %s23, 0
      %p107 = por %p105, %p106
      %p108 = scmp.ne.s32.totalorder %s96, %s97
      %p109 = scmp.eq.s32.totalorder %s24, 1
      %p110 = por %p108, %p109
      %p112 = scmp.ne.s32.totalorder %s97, %s111
      %p113 = scmp.eq.s32.totalorder %s24, 0
      %p114 = por %p112, %p113
      %s115 = ssub.s32 %s25, %s37
      %p116 = scmp.eq.s32.totalorder %s115, 0
      %s118 = sadd.s32 %s117, 1
      %s119 = scalar_select %p116, %s117, %s118
      %p122 = pneg %p116
      %p123 = scmp.eq.s32.totalorder %s18, 1
      %p124 = por %p122, %p123
      %p125 = scmp.ne.s32.totalorder %s117, %s120
      %p126 = scmp.eq.s32.totalorder %s18, 0
      %p127 = por %p125, %p126
      %p128 = scmp.ne.s32.totalorder %s117, %s120
      %p129 = scmp.eq.s32.totalorder %s23, 1
      %p130 = por %p128, %p129
      %p131 = scmp.ne.s32.totalorder %s120, %s121
      %p132 = scmp.eq.s32.totalorder %s23, 0
      %p133 = por %p131, %p132
      %p134 = scmp.ne.s32.totalorder %s120, %s121
      %p135 = scmp.eq.s32.totalorder %s24, 1
      %p136 = por %p134, %p135
      %p138 = scmp.ne.s32.totalorder %s121, %s137
      %p139 = scmp.eq.s32.totalorder %s24, 0
      %p140 = por %p138, %p139
      %p141 = scmp.le.s32.totalorder 1, %s18
      %p142 = scmp.lt.s32.totalorder %s18, 3
      %p143 = pnand %p141, %p142
      %p144 = pneg %p143
      // Predicated region
      $region9: #{tpu_custom_call.1} parent=5 // pred_check
        _
      $region10: #{tpu_custom_call.1} parent=5 // pred_check_branch
        %146 = sbr.rel (%p143) target = $region12
      $region11: #{tpu_custom_call.1} parent=5 // pred_region
        %s147 = ssub.s32 %s18, 1
        // Predicated region
        $region13: #{tpu_custom_call.1} parent=11 // pred_check
          %p148 = pneg %p107
        $region14: #{tpu_custom_call.1} parent=11 // pred_check_branch
          %150 = sbr.rel (%p148) target = $region16
        $region15: #{tpu_custom_call.1} parent=11 // pred_region
          _
        $region16: #{tpu_custom_call.1} parent=11 // pred_fallthru
          _
      $region12: #{tpu_custom_call.1} parent=5 // pred_fallthru
        _
      %p151 = scmp.lt.s32.totalorder %s18, 2
      // Predicated region
      $region17: #{tpu_custom_call.1} parent=5 // pred_check
        %p152 = pneg %p151
      $region18: #{tpu_custom_call.1} parent=5 // pred_check_branch
        %154 = sbr.rel (%p152) target = $region20
      $region19: #{tpu_custom_call.1} parent=5 // pred_region
        // Predicated region
        $region21: #{tpu_custom_call.1} parent=19 // pred_check
          %p155 = pneg %p52
        $region22: #{tpu_custom_call.1} parent=19 // pred_check_branch
          %157 = sbr.rel (%p155) target = $region24
        $region23: #{tpu_custom_call.1} parent=19 // pred_region
          %s158 = sand.u32 %s42, 1
          %s159 = scalar_lea.sflag [#allocation4], %s158
          %s160 = sand.u32 %s42, 1
          %s161 = smul.addr %s160, 96
          %s162 = scalar_lea.vmem [#allocation3], %s161
          %s163 = sadd.s32 %s25, %s26
          %s164 = smul.u32 4, %s163
          %s166 = ssub.s32 1536, 1536
          %167 = vsyncadd %s159, %s166
          %s168 = smul.addr %s164, 3
          %s169 = smul.addr %s168, 128
          %s170 = scalar_lea.hbm %s0, %s169
          %s171 = sshll.u32 %s162, 4
          %s172 = int_to_ptr.vmem [resolvable:$true] %s171
          %177 = dma.hbm_to_vmem [thread:$0]  %s170, 1536, %s172, %s159, 384, 384, 24
        $region24: #{tpu_custom_call.1} parent=19 // pred_fallthru
          _
        // Predicated region
        $region25: #{tpu_custom_call.1} parent=19 // pred_check
          %p178 = pneg %p80
        $region26: #{tpu_custom_call.1} parent=19 // pred_check_branch
          %180 = sbr.rel (%p178) target = $region28
        $region27: #{tpu_custom_call.1} parent=19 // pred_region
          %s181 = sand.u32 %s70, 1
          %s182 = scalar_lea.sflag [#allocation7], %s181
          %s183 = sand.u32 %s70, 1
          %s184 = smul.addr %s183, 24
          %s185 = scalar_lea.vmem [#allocation6], %s184
          %s186 = sadd.s32 %s25, %s26
          %s188 = ssub.s32 384, 384
          %189 = vsyncadd %s182, %s188
          %s190 = smul.addr %s186, 3
          %s191 = smul.addr %s190, 128
          %s192 = scalar_lea.hbm %s1, %s191
          %s194 = sshll.u32 %s185, 4
          %s195 = int_to_ptr.vmem [resolvable:$true] %s194
          %197 = dma.hbm_to_vmem [thread:$0]  %s192, 384, %s195, %s182
        $region28: #{tpu_custom_call.1} parent=19 // pred_fallthru
          _
      $region20: #{tpu_custom_call.1} parent=5 // pred_fallthru
        _
      %p198 = scmp.le.s32.totalorder 1, %s18
      %p199 = scmp.lt.s32.totalorder %s18, 3
      %p200 = pnand %p198, %p199
      %p201 = pneg %p200
      // Predicated region
      $region29: #{tpu_custom_call.1} parent=5 // pred_check
        _
      $region30: #{tpu_custom_call.1} parent=5 // pred_check_branch
        %203 = sbr.rel (%p200) target = $region32
      $region31: #{tpu_custom_call.1} parent=5 // pred_region
        %s204 = ssub.s32 %s18, 1
        %s205 = sand.u32 %s45, 1
        %s206 = scalar_lea.sflag [#allocation4], %s205
        %s207 = sand.u32 %s45, 1
        %s208 = smul.addr %s207, 96
        %s209 = scalar_lea.vmem [#allocation3], %s208
        // Predicated region
        $region33: #{tpu_custom_call.1} parent=31 // pred_check
          %p210 = pneg %p58
        $region34: #{tpu_custom_call.1} parent=31 // pred_check_branch
          %212 = sbr.rel (%p210) target = $region36
        $region35: #{tpu_custom_call.1} parent=31 // pred_region
          %213 = dma.done %s206, 1536
        $region36: #{tpu_custom_call.1} parent=31 // pred_fallthru
          _
        %s214 = sand.u32 %s73, 1
        %s215 = scalar_lea.sflag [#allocation7], %s214
        %s216 = sand.u32 %s73, 1
        %s217 = smul.addr %s216, 24
        %s218 = scalar_lea.vmem [#allocation6], %s217
        // Predicated region
        $region37: #{tpu_custom_call.1} parent=31 // pred_check
          %p219 = pneg %p86
        $region38: #{tpu_custom_call.1} parent=31 // pred_check_branch
          %221 = sbr.rel (%p219) target = $region40
        $region39: #{tpu_custom_call.1} parent=31 // pred_region
          %222 = dma.done %s215, 384
        $region40: #{tpu_custom_call.1} parent=31 // pred_fallthru
          _
        %s223 = sand.u32 %s45, 1
        %s224 = scalar_lea.sflag [#allocation4], %s223
        %s225 = sand.u32 %s45, 1
        %s226 = smul.addr %s225, 96
        %s227 = scalar_lea.vmem [#allocation3], %s226
        %p228 = pneg %p58
        %p229 = pneg %p55
        %s230 = sand.u32 %s73, 1
        %s231 = scalar_lea.sflag [#allocation7], %s230
        %s232 = sand.u32 %s73, 1
        %s233 = smul.addr %s232, 24
        %s234 = scalar_lea.vmem [#allocation6], %s233
        %p235 = pneg %p86
        %p236 = pneg %p83
        %p237 = pneg %p107
        %p238 = pneg %p104
        %p239 = pneg %p133
        %p240 = pneg %p130
        %s241 = sand.u32 %s120, 1
        %s242 = scalar_lea.sflag [#allocation5], %s241
        %s243 = sand.u32 %s120, 1
        %s244 = smul.addr %s243, 24
        %s245 = scalar_lea.vmem [#allocation8], %s244
        %s246 = sadd.s32 %s27, %s28
        %s247 = smul.u32 4, %s246
        %s248 = sadd.s32 %s27, %s28
        %p249 = scmp.eq.s32.totalorder %s28, 0
        // Predicated region
        $region41: #{tpu_custom_call.1} parent=31 // pred_check
          %p250 = pneg %p249
        $region42: #{tpu_custom_call.1} parent=31 // pred_check_branch
          %252 = sbr.rel (%p250) target = $region44
        $region43: #{tpu_custom_call.1} parent=31 // pred_region
          %253 = vst [vmem:[#allocation2] sm:$0xff] 0.0
          %254 = vst [vmem:[#allocation2 + $0x8] sm:$0xff] 0.0
          %255 = vst [vmem:[#allocation2 + $0x10] sm:$0xff] 0.0
        $region44: #{tpu_custom_call.1} parent=31 // pred_fallthru
          _
        %v256 = vld [vmem:[%s209] sm:$0xff]
        %v257 = vld [vmem:[%s209 + $0x8] sm:$0xff]
        %v258 = vld [vmem:[%s209 + $0x10] sm:$0xff]
        %v259 = vld [vmem:[%s209 + $0x18] sm:$0xff]
        %v260 = vld [vmem:[%s209 + $0x20] sm:$0xff]
        %v261 = vld [vmem:[%s209 + $0x28] sm:$0xff]
        %v262 = vld [vmem:[%s209 + $0x30] sm:$0xff]
        %v263 = vld [vmem:[%s209 + $0x38] sm:$0xff]
        %v264 = vld [vmem:[%s209 + $0x40] sm:$0xff]
        %v265 = vld [vmem:[%s209 + $0x48] sm:$0xff]
        %v266 = vld [vmem:[%s209 + $0x50] sm:$0xff]
        %v267 = vld [vmem:[%s209 + $0x58] sm:$0xff]
        %v268 = vld [vmem:[%s218] sm:$0xff]
        %v269 = vld [vmem:[%s218 + $0x8] sm:$0xff]
        %v270 = vld [vmem:[%s218 + $0x10] sm:$0xff]
        %v271 = vunpack.c.0.s8 %v268
        %v272 = vunpack.c.0.s8 %v269
        %v273 = vunpack.c.0.s8 %v270
        %v274 = vunpack.c.1.s8 %v268
        %v275 = vunpack.c.1.s8 %v269
        %v276 = vunpack.c.1.s8 %v270
        %v277 = vunpack.c.2.s8 %v268
        %v278 = vunpack.c.2.s8 %v269
        %v279 = vunpack.c.2.s8 %v270
        %v280 = vunpack.c.3.s8 %v268
        %v281 = vunpack.c.3.s8 %v269
        %v282 = vunpack.c.3.s8 %v270
        %v283 = vcvt.s32.f32 %v271
        %v284 = vcvt.s32.f32 %v272
        %v285 = vcvt.s32.f32 %v273
        %v286 = vcvt.s32.f32 %v274
        %v287 = vcvt.s32.f32 %v275
        %v288 = vcvt.s32.f32 %v276
        %v289 = vcvt.s32.f32 %v277
        %v290 = vcvt.s32.f32 %v278
        %v291 = vcvt.s32.f32 %v279
        %v292 = vcvt.s32.f32 %v280
        %v293 = vcvt.s32.f32 %v281
        %v294 = vcvt.s32.f32 %v282
        %vm295 = vcmp.ne.f32.partialorder %v283, -1.0
        %vm296 = vcmp.ne.f32.partialorder %v284, -1.0
        %vm297 = vcmp.ne.f32.partialorder %v285, -1.0
        %vm298 = vcmp.ne.f32.partialorder %v286, -1.0
        %vm299 = vcmp.ne.f32.partialorder %v287, -1.0
        %vm300 = vcmp.ne.f32.partialorder %v288, -1.0
        %vm301 = vcmp.ne.f32.partialorder %v289, -1.0
        %vm302 = vcmp.ne.f32.partialorder %v290, -1.0
        %vm303 = vcmp.ne.f32.partialorder %v291, -1.0
        %vm304 = vcmp.ne.f32.partialorder %v292, -1.0
        %vm305 = vcmp.ne.f32.partialorder %v293, -1.0
        %vm306 = vcmp.ne.f32.partialorder %v294, -1.0
        %v307 = vsel %vm295, 1, 0
        %v308 = vsel %vm296, 1, 0
        %v309 = vsel %vm297, 1, 0
        %v310 = vsel %vm298, 1, 0
        %v311 = vsel %vm299, 1, 0
        %v312 = vsel %vm300, 1, 0
        %v313 = vsel %vm301, 1, 0
        %v314 = vsel %vm302, 1, 0
        %v315 = vsel %vm303, 1, 0
        %v316 = vsel %vm304, 1, 0
        %v317 = vsel %vm305, 1, 0
        %v318 = vsel %vm306, 1, 0
        %v319 = vcvt.s32.f32 %v307
        %v320 = vcvt.s32.f32 %v308
        %v321 = vcvt.s32.f32 %v309
        %v322 = vcvt.s32.f32 %v310
        %v323 = vcvt.s32.f32 %v311
        %v324 = vcvt.s32.f32 %v312
        %v325 = vcvt.s32.f32 %v313
        %v326 = vcvt.s32.f32 %v314
        %v327 = vcvt.s32.f32 %v315
        %v328 = vcvt.s32.f32 %v316
        %v329 = vcvt.s32.f32 %v317
        %v330 = vcvt.s32.f32 %v318
        %vm331 = vcmp.gt.f32.partialorder %v283, 0.0
        %vm332 = vcmp.gt.f32.partialorder %v284, 0.0
        %vm333 = vcmp.gt.f32.partialorder %v285, 0.0
        %vm334 = vcmp.gt.f32.partialorder %v286, 0.0
        %vm335 = vcmp.gt.f32.partialorder %v287, 0.0
        %vm336 = vcmp.gt.f32.partialorder %v288, 0.0
        %vm337 = vcmp.gt.f32.partialorder %v289, 0.0
        %vm338 = vcmp.gt.f32.partialorder %v290, 0.0
        %vm339 = vcmp.gt.f32.partialorder %v291, 0.0
        %vm340 = vcmp.gt.f32.partialorder %v292, 0.0
        %vm341 = vcmp.gt.f32.partialorder %v293, 0.0
        %vm342 = vcmp.gt.f32.partialorder %v294, 0.0
        %v343 = vsel %vm331, 1, 0
        %v344 = vsel %vm332, 1, 0
        %v345 = vsel %vm333, 1, 0
        %v346 = vsel %vm334, 1, 0
        %v347 = vsel %vm335, 1, 0
        %v348 = vsel %vm336, 1, 0
        %v349 = vsel %vm337, 1, 0
        %v350 = vsel %vm338, 1, 0
        %v351 = vsel %vm339, 1, 0
        %v352 = vsel %vm340, 1, 0
        %v353 = vsel %vm341, 1, 0
        %v354 = vsel %vm342, 1, 0
        %v355 = vcvt.s32.f32 %v343
        %v356 = vcvt.s32.f32 %v344
        %v357 = vcvt.s32.f32 %v345
        %v358 = vcvt.s32.f32 %v346
        %v359 = vcvt.s32.f32 %v347
        %v360 = vcvt.s32.f32 %v348
        %v361 = vcvt.s32.f32 %v349
        %v362 = vcvt.s32.f32 %v350
        %v363 = vcvt.s32.f32 %v351
        %v364 = vcvt.s32.f32 %v352
        %v365 = vcvt.s32.f32 %v353
        %v366 = vcvt.s32.f32 %v354
        %v367 = vld [vmem:[%s2] sm:$0x7]
        %v369 = vlaneseq
        %v370 = vshrl.u32 %v369, 7
        %v371 = vsub.s32 0, %v370
        %v372 = vrot.slane %v367, %v371
        %v373 = vlaneseq
        %v374 = vshrl.u32 %v373, 7
        %v375 = vsub.s32 1, %v374
        %v376 = vrot.slane %v367, %v375
        %v377 = vlaneseq
        %v378 = vshrl.u32 %v377, 7
        %v379 = vsub.s32 2, %v378
        %v380 = vrot.slane %v367, %v379
        %v384 = vmul.f32 %v372, %v355
        %v385 = vmul.f32 %v376, %v356
        %v386 = vmul.f32 %v380, %v357
        %v387 = vmul.f32 %v372, %v358
        %v388 = vmul.f32 %v376, %v359
        %v389 = vmul.f32 %v380, %v360
        %v390 = vmul.f32 %v372, %v361
        %v391 = vmul.f32 %v376, %v362
        %v392 = vmul.f32 %v380, %v363
        %v393 = vmul.f32 %v372, %v364
        %v394 = vmul.f32 %v376, %v365
        %v395 = vmul.f32 %v380, %v366
        %v396 = vadd.f32 %v384, 1.0
        %v397 = vadd.f32 %v385, 1.0
        %v398 = vadd.f32 %v386, 1.0
        %v399 = vadd.f32 %v387, 1.0
        %v400 = vadd.f32 %v388, 1.0
        %v401 = vadd.f32 %v389, 1.0
        %v402 = vadd.f32 %v390, 1.0
        %v403 = vadd.f32 %v391, 1.0
        %v404 = vadd.f32 %v392, 1.0
        %v405 = vadd.f32 %v393, 1.0
        %v406 = vadd.f32 %v394, 1.0
        %v407 = vadd.f32 %v395, 1.0
        %v408 = vand.u32 2147483647, %v256
        %v409 = vand.u32 2147483647, %v257
        %v410 = vand.u32 2147483647, %v258
        %v411 = vand.u32 2147483647, %v259
        %v412 = vand.u32 2147483647, %v260
        %v413 = vand.u32 2147483647, %v261
        %v414 = vand.u32 2147483647, %v262
        %v415 = vand.u32 2147483647, %v263
        %v416 = vand.u32 2147483647, %v264
        %v417 = vand.u32 2147483647, %v265
        %v418 = vand.u32 2147483647, %v266
        %v419 = vand.u32 2147483647, %v267
        %v420 = vsub.f32 0.0, %v408
        %v421 = vsub.f32 0.0, %v409
        %v422 = vsub.f32 0.0, %v410
        %v423 = vsub.f32 0.0, %v411
        %v424 = vsub.f32 0.0, %v412
        %v425 = vsub.f32 0.0, %v413
        %v426 = vsub.f32 0.0, %v414
        %v427 = vsub.f32 0.0, %v415
        %v428 = vsub.f32 0.0, %v416
        %v429 = vsub.f32 0.0, %v417
        %v430 = vsub.f32 0.0, %v418
        %v431 = vsub.f32 0.0, %v419
        %v432 = vmul.f32 %v420, 1.442695
        %v433 = vpow.pop %v432
        %v434 = vmul.f32 %v421, 1.442695
        %v435 = vpow.pop %v434
        %v436 = vmul.f32 %v422, 1.442695
        %v437 = vpow.pop %v436
        %v438 = vmul.f32 %v423, 1.442695
        %v439 = vpow.pop %v438
        %v440 = vmul.f32 %v424, 1.442695
        %v441 = vpow.pop %v440
        %v442 = vmul.f32 %v425, 1.442695
        %v443 = vpow.pop %v442
        %v444 = vmul.f32 %v426, 1.442695
        %v445 = vpow.pop %v444
        %v446 = vmul.f32 %v427, 1.442695
        %v447 = vpow.pop %v446
        %v448 = vmul.f32 %v428, 1.442695
        %v449 = vpow.pop %v448
        %v450 = vmul.f32 %v429, 1.442695
        %v451 = vpow.pop %v450
        %v452 = vmul.f32 %v430, 1.442695
        %v453 = vpow.pop %v452
        %v454 = vmul.f32 %v431, 1.442695
        %v455 = vpow.pop %v454
        %v456 = vadd.f32 %v433, 1.0
        %v457 = vlog2.pop %v456
        %v458 = vmul.f32 %v457, 0.6931472
        %v459 = vmul.f32 -0.5, %v433
        %v460 = vadd.f32 %v459, 1.0
        %v461 = vmul.f32 %v460, %v433
        %v462 = vand.u32 2147483647, %v433
        %vm463 = vcmp.lt.f32.partialorder %v462, 0.0004427343
        %v464 = vsel %vm463, %v461, %v458
        %v465 = vadd.f32 %v435, 1.0
        %v466 = vlog2.pop %v465
        %v467 = vmul.f32 %v466, 0.6931472
        %v468 = vmul.f32 -0.5, %v435
        %v469 = vadd.f32 %v468, 1.0
        %v470 = vmul.f32 %v469, %v435
        %v471 = vand.u32 2147483647, %v435
        %vm472 = vcmp.lt.f32.partialorder %v471, 0.0004427343
        %v473 = vsel %vm472, %v470, %v467
        %v474 = vadd.f32 %v437, 1.0
        %v475 = vlog2.pop %v474
        %v476 = vmul.f32 %v475, 0.6931472
        %v477 = vmul.f32 -0.5, %v437
        %v478 = vadd.f32 %v477, 1.0
        %v479 = vmul.f32 %v478, %v437
        %v480 = vand.u32 2147483647, %v437
        %vm481 = vcmp.lt.f32.partialorder %v480, 0.0004427343
        %v482 = vsel %vm481, %v479, %v476
        %v483 = vadd.f32 %v439, 1.0
        %v484 = vlog2.pop %v483
        %v485 = vmul.f32 %v484, 0.6931472
        %v486 = vmul.f32 -0.5, %v439
        %v487 = vadd.f32 %v486, 1.0
        %v488 = vmul.f32 %v487, %v439
        %v489 = vand.u32 2147483647, %v439
        %vm490 = vcmp.lt.f32.partialorder %v489, 0.0004427343
        %v491 = vsel %vm490, %v488, %v485
        %v492 = vadd.f32 %v441, 1.0
        %v493 = vlog2.pop %v492
        %v494 = vmul.f32 %v493, 0.6931472
        %v495 = vmul.f32 -0.5, %v441
        %v496 = vadd.f32 %v495, 1.0
        %v497 = vmul.f32 %v496, %v441
        %v498 = vand.u32 2147483647, %v441
        %vm499 = vcmp.lt.f32.partialorder %v498, 0.0004427343
        %v500 = vsel %vm499, %v497, %v494
        %v501 = vadd.f32 %v443, 1.0
        %v502 = vlog2.pop %v501
        %v503 = vmul.f32 %v502, 0.6931472
        %v504 = vmul.f32 -0.5, %v443
        %v505 = vadd.f32 %v504, 1.0
        %v506 = vmul.f32 %v505, %v443
        %v507 = vand.u32 2147483647, %v443
        %vm508 = vcmp.lt.f32.partialorder %v507, 0.0004427343
        %v509 = vsel %vm508, %v506, %v503
        %v510 = vadd.f32 %v445, 1.0
        %v511 = vlog2.pop %v510
        %v512 = vmul.f32 %v511, 0.6931472
        %v513 = vmul.f32 -0.5, %v445
        %v514 = vadd.f32 %v513, 1.0
        %v515 = vmul.f32 %v514, %v445
        %v516 = vand.u32 2147483647, %v445
        %vm517 = vcmp.lt.f32.partialorder %v516, 0.0004427343
        %v518 = vsel %vm517, %v515, %v512
        %v519 = vadd.f32 %v447, 1.0
        %v520 = vlog2.pop %v519
        %v521 = vmul.f32 %v520, 0.6931472
        %v522 = vmul.f32 -0.5, %v447
        %v523 = vadd.f32 %v522, 1.0
        %v524 = vmul.f32 %v523, %v447
        %v525 = vand.u32 2147483647, %v447
        %vm526 = vcmp.lt.f32.partialorder %v525, 0.0004427343
        %v527 = vsel %vm526, %v524, %v521
        %v528 = vadd.f32 %v449, 1.0
        %v529 = vlog2.pop %v528
        %v530 = vmul.f32 %v529, 0.6931472
        %v531 = vmul.f32 -0.5, %v449
        %v532 = vadd.f32 %v531, 1.0
        %v533 = vmul.f32 %v532, %v449
        %v534 = vand.u32 2147483647, %v449
        %vm535 = vcmp.lt.f32.partialorder %v534, 0.0004427343
        %v536 = vsel %vm535, %v533, %v530
        %v537 = vadd.f32 %v451, 1.0
        %v538 = vlog2.pop %v537
        %v539 = vmul.f32 %v538, 0.6931472
        %v540 = vmul.f32 -0.5, %v451
        %v541 = vadd.f32 %v540, 1.0
        %v542 = vmul.f32 %v541, %v451
        %v543 = vand.u32 2147483647, %v451
        %vm544 = vcmp.lt.f32.partialorder %v543, 0.0004427343
        %v545 = vsel %vm544, %v542, %v539
        %v546 = vadd.f32 %v453, 1.0
        %v547 = vlog2.pop %v546
        %v548 = vmul.f32 %v547, 0.6931472
        %v549 = vmul.f32 -0.5, %v453
        %v550 = vadd.f32 %v549, 1.0
        %v551 = vmul.f32 %v550, %v453
        %v552 = vand.u32 2147483647, %v453
        %vm553 = vcmp.lt.f32.partialorder %v552, 0.0004427343
        %v554 = vsel %vm553, %v551, %v548
        %v555 = vadd.f32 %v455, 1.0
        %v556 = vlog2.pop %v555
        %v557 = vmul.f32 %v556, 0.6931472
        %v558 = vmul.f32 -0.5, %v455
        %v559 = vadd.f32 %v558, 1.0
        %v560 = vmul.f32 %v559, %v455
        %v561 = vand.u32 2147483647, %v455
        %vm562 = vcmp.lt.f32.partialorder %v561, 0.0004427343
        %v563 = vsel %vm562, %v560, %v557
        %v564 = vsub.f32 0.0, %v256
        %v565 = vsub.f32 0.0, %v257
        %v566 = vsub.f32 0.0, %v258
        %v567 = vsub.f32 0.0, %v259
        %v568 = vsub.f32 0.0, %v260
        %v569 = vsub.f32 0.0, %v261
        %v570 = vsub.f32 0.0, %v262
        %v571 = vsub.f32 0.0, %v263
        %v572 = vsub.f32 0.0, %v264
        %v573 = vsub.f32 0.0, %v265
        %v574 = vsub.f32 0.0, %v266
        %v575 = vsub.f32 0.0, %v267
        %v576 = vmax.f32 %v564, 0.0
        %v577 = vmax.f32 %v565, 0.0
        %v578 = vmax.f32 %v566, 0.0
        %v579 = vmax.f32 %v567, 0.0
        %v580 = vmax.f32 %v568, 0.0
        %v581 = vmax.f32 %v569, 0.0
        %v582 = vmax.f32 %v570, 0.0
        %v583 = vmax.f32 %v571, 0.0
        %v584 = vmax.f32 %v572, 0.0
        %v585 = vmax.f32 %v573, 0.0
        %v586 = vmax.f32 %v574, 0.0
        %v587 = vmax.f32 %v575, 0.0
        %v588 = vadd.f32 %v464, %v576
        %v589 = vadd.f32 %v473, %v577
        %v590 = vadd.f32 %v482, %v578
        %v591 = vadd.f32 %v491, %v579
        %v592 = vadd.f32 %v500, %v580
        %v593 = vadd.f32 %v509, %v581
        %v594 = vadd.f32 %v518, %v582
        %v595 = vadd.f32 %v527, %v583
        %v596 = vadd.f32 %v536, %v584
        %v597 = vadd.f32 %v545, %v585
        %v598 = vadd.f32 %v554, %v586
        %v599 = vadd.f32 %v563, %v587
        %v600 = vsub.f32 1.0, %v355
        %v601 = vsub.f32 1.0, %v356
        %v602 = vsub.f32 1.0, %v357
        %v603 = vsub.f32 1.0, %v358
        %v604 = vsub.f32 1.0, %v359
        %v605 = vsub.f32 1.0, %v360
        %v606 = vsub.f32 1.0, %v361
        %v607 = vsub.f32 1.0, %v362
        %v608 = vsub.f32 1.0, %v363
        %v609 = vsub.f32 1.0, %v364
        %v610 = vsub.f32 1.0, %v365
        %v611 = vsub.f32 1.0, %v366
        %v612 = vmul.f32 %v600, %v256
        %v613 = vmul.f32 %v601, %v257
        %v614 = vmul.f32 %v602, %v258
        %v615 = vmul.f32 %v603, %v259
        %v616 = vmul.f32 %v604, %v260
        %v617 = vmul.f32 %v605, %v261
        %v618 = vmul.f32 %v606, %v262
        %v619 = vmul.f32 %v607, %v263
        %v620 = vmul.f32 %v608, %v264
        %v621 = vmul.f32 %v609, %v265
        %v622 = vmul.f32 %v610, %v266
        %v623 = vmul.f32 %v611, %v267
        %v624 = vmul.f32 %v396, %v588
        %v625 = vmul.f32 %v397, %v589
        %v626 = vmul.f32 %v398, %v590
        %v627 = vmul.f32 %v399, %v591
        %v628 = vmul.f32 %v400, %v592
        %v629 = vmul.f32 %v401, %v593
        %v630 = vmul.f32 %v402, %v594
        %v631 = vmul.f32 %v403, %v595
        %v632 = vmul.f32 %v404, %v596
        %v633 = vmul.f32 %v405, %v597
        %v634 = vmul.f32 %v406, %v598
        %v635 = vmul.f32 %v407, %v599
        %v636 = vadd.f32 %v612, %v624
        %v637 = vadd.f32 %v613, %v625
        %v638 = vadd.f32 %v614, %v626
        %v639 = vadd.f32 %v615, %v627
        %v640 = vadd.f32 %v616, %v628
        %v641 = vadd.f32 %v617, %v629
        %v642 = vadd.f32 %v618, %v630
        %v643 = vadd.f32 %v619, %v631
        %v644 = vadd.f32 %v620, %v632
        %v645 = vadd.f32 %v621, %v633
        %v646 = vadd.f32 %v622, %v634
        %v647 = vadd.f32 %v623, %v635
        %v648 = vmul.f32 %v319, %v636
        %v649 = vmul.f32 %v320, %v637
        %v650 = vmul.f32 %v321, %v638
        %v651 = vmul.f32 %v322, %v639
        %v652 = vmul.f32 %v323, %v640
        %v653 = vmul.f32 %v324, %v641
        %v654 = vmul.f32 %v325, %v642
        %v655 = vmul.f32 %v326, %v643
        %v656 = vmul.f32 %v327, %v644
        %v657 = vmul.f32 %v328, %v645
        %v658 = vmul.f32 %v329, %v646
        %v659 = vmul.f32 %v330, %v647
        %v660 = vld [vmem:[#allocation2] sm:$0xff]
        %v661 = vld [vmem:[#allocation2 + $0x8] sm:$0xff]
        %v662 = vld [vmem:[#allocation2 + $0x10] sm:$0xff]
        %v663 = vadd.f32 %v648, %v651
        %v664 = vadd.f32 %v663, %v654
        %v665 = vadd.f32 %v664, %v657
        %v666 = vadd.f32 %v649, %v652
        %v667 = vadd.f32 %v666, %v655
        %v668 = vadd.f32 %v667, %v658
        %v669 = vadd.f32 %v650, %v653
        %v670 = vadd.f32 %v669, %v656
        %v671 = vadd.f32 %v670, %v659
        %v672 = vadd.f32 %v660, %v665
        %v673 = vadd.f32 %v661, %v668
        %v674 = vadd.f32 %v662, %v671
        %675 = vst [vmem:[#allocation2] sm:$0xff] %v672
        %676 = vst [vmem:[#allocation2 + $0x8] sm:$0xff] %v673
        %677 = vst [vmem:[#allocation2 + $0x10] sm:$0xff] %v674
        // Predicated region
        $region45: #{tpu_custom_call.1} parent=31 // pred_check
          %p678 = pneg %p249
        $region46: #{tpu_custom_call.1} parent=31 // pred_check_branch
          %680 = sbr.rel (%p678) target = $region48
        $region47: #{tpu_custom_call.1} parent=31 // pred_region
          %v681 = vld [vmem:[#allocation2] sm:$0xff]
          %v682 = vld [vmem:[#allocation2 + $0x8] sm:$0xff]
          %v683 = vld [vmem:[#allocation2 + $0x10] sm:$0xff]
          %684 = vst [vmem:[%s245] sm:$0xff] %v681
          %685 = vst [vmem:[%s245 + $0x8] sm:$0xff] %v682
          %686 = vst [vmem:[%s245 + $0x10] sm:$0xff] %v683
        $region48: #{tpu_custom_call.1} parent=31 // pred_fallthru
          _
        %s687 = sand.u32 %s120, 1
        %s688 = scalar_lea.sflag [#allocation5], %s687
        %s689 = sand.u32 %s120, 1
        %s690 = smul.addr %s689, 24
        %s691 = scalar_lea.vmem [#allocation8], %s690
        // Predicated region
        $region49: #{tpu_custom_call.1} parent=31 // pred_check
          %p692 = pneg %p130
        $region50: #{tpu_custom_call.1} parent=31 // pred_check_branch
          %694 = sbr.rel (%p692) target = $region52
        $region51: #{tpu_custom_call.1} parent=31 // pred_region
          %s696 = ssub.s32 384, 384
          %697 = vsyncadd %s688, %s696
          %s698 = smul.addr %s27, 3
          %s699 = smul.addr %s698, 128
          %s700 = scalar_lea.hbm %s3, %s699
          %s702 = sshll.u32 %s691, 4
          %s703 = int_to_ptr.vmem [resolvable:$true] %s702
          %705 = dma.vmem_to_hbm [thread:$0]  %s703, 384, %s700, %s688
        $region52: #{tpu_custom_call.1} parent=31 // pred_fallthru
          _
      $region32: #{tpu_custom_call.1} parent=5 // pred_fallthru
        _
      %p706 = scmp.le.s32.totalorder 2, %s18
      // Predicated region
      $region53: #{tpu_custom_call.1} parent=5 // pred_check
        %p707 = pneg %p706
      $region54: #{tpu_custom_call.1} parent=5 // pred_check_branch
        %709 = sbr.rel (%p707) target = $region56
      $region55: #{tpu_custom_call.1} parent=5 // pred_region
        %s710 = ssub.s32 %s18, 2
        // Predicated region
        $region57: #{tpu_custom_call.1} parent=55 // pred_check
          %p711 = pneg %p136
        $region58: #{tpu_custom_call.1} parent=55 // pred_check_branch
          %713 = sbr.rel (%p711) target = $region60
        $region59: #{tpu_custom_call.1} parent=55 // pred_region
          %s714 = sand.u32 %s121, 1
          %s715 = scalar_lea.sflag [#allocation5], %s714
          %s716 = sand.u32 %s121, 1
          %s717 = smul.addr %s716, 24
          %s718 = scalar_lea.vmem [#allocation8], %s717
          %719 = dma.done %s715, 384
        $region60: #{tpu_custom_call.1} parent=55 // pred_fallthru
          _
      $region56: #{tpu_custom_call.1} parent=5 // pred_fallthru
        _
    $region6: #{tpu_custom_call.1} parent=1 // loop_footer
      %s22 = sadd.s32 1, %s18
    $region7: #{tpu_custom_call.1} parent=1 // loop_footer_branch
      %17 = sbr.rel target = $region3
    $region8: #{tpu_custom_call.1} parent=1 // loop_exit
      _
    %720 = vsyncpa [#allocation4], 1
    %s721 = scalar_lea.sflag [#allocation4], 1
    %722 = vsyncpa %s721, 1
    %723 = vsyncpa [#allocation7], 1
    %s724 = scalar_lea.sflag [#allocation7], 1
    %725 = vsyncpa %s724, 1
    %726 = vsyncpa [#allocation5], 1
    %s727 = scalar_lea.sflag [#allocation5], 1
    %728 = vsyncpa %s727, 1

</llo_original>
